<compile_context>
chip_gen: v7x
topology: tpu7x:2x2x1
jax: 0.10.0
libtpu: 0.0.40
codegen_flags: <defaults>
</compile_context>

<pallas_src>
import jax
import jax.numpy as jnp
from jax.experimental import pallas as pl
from jax.experimental.pallas import tpu as pltpu

_HIDDEN = 64
_TM_MAX = 2048   # max batch rows per grid step


def _dqn_kernel(x_ref, w1_ref, b1_ref, w2_ref, b2_ref, w3_ref, b3_ref, o_ref):
    """Fused MLP on one (TM, S) batch tile.

    x arrives in f32 and is cast to bf16 in-kernel (free on the VPU, removes a
    wrapper pass over x).  Weights are bf16 MXU operands; accumulation, bias
    adds and ReLU stay in f32 (v5e's VPU has no bf16 path).
    """
    x = x_ref[...].astype(jnp.bfloat16)                              # bf16 [TM, S]

    h1 = jnp.dot(x, w1_ref[...], preferred_element_type=jnp.float32)
    h1 = jnp.maximum(h1 + b1_ref[...], 0.0)                          # f32 [TM, 64]

    h2 = jnp.dot(h1.astype(jnp.bfloat16), w2_ref[...],
                 preferred_element_type=jnp.float32)
    h2 = jnp.maximum(h2 + b2_ref[...], 0.0)                          # f32 [TM, 64]

    q = jnp.dot(h2.astype(jnp.bfloat16), w3_ref[...],
                preferred_element_type=jnp.float32)
    o_ref[...] = (q + b3_ref[...]).astype(o_ref.dtype)               # f32 [TM, A]


def _round_up(n, m):
    return ((n + m - 1) // m) * m


def _cdiv(a, b):
    return -(-a // b)


def prepare_dqn_params(w1, b1, w2, b2, w3, b3):
    """One-time conversion to kernel operand dtypes (hoisted out of the jitted
    forward so the casts don't re-execute as small XLA kernels every call)."""
    return (w1.astype(jnp.bfloat16), b1.astype(jnp.float32),
            w2.astype(jnp.bfloat16), b2.astype(jnp.float32),
            w3.astype(jnp.bfloat16), b3.astype(jnp.float32))


@jax.jit
def dqn_forward(x, w1, b1, w2, b2, w3, b3):
    """Fused DQN forward.

    Shapes:
      x : f32 [B, S]      w1: bf16 [S, 64]   b1: f32 [1, 64]
      w2: bf16 [64, 64]   b2: f32 [1, 64]
      w3: bf16 [64, A]    b3: f32 [1, A]
      out: f32 [B, A]
    """
    B, S = x.shape
    A = w3.shape[1]

    # --- batch tiling (static under jit): near-equal tiles, multiple of 16,
    #     capped at _TM_MAX, and >= 2 grid steps for large batches (v7x megacore).
    n_tiles = max(1, _cdiv(B, _TM_MAX))
    if n_tiles == 1 and B > 16:
        n_tiles = 2
    TM = max(16, _round_up(_cdiv(B, n_tiles), 16))
    B_pad = _round_up(B, TM)

    x_p = jnp.pad(x, ((0, B_pad - B), (0, 0))) if B_pad != B else x

    grid = (B_pad // TM,)

    # Weights/biases: full-array blocks with a constant index_map so they stay
    # resident in VMEM across all batch-grid steps.
    const = lambda a: pl.BlockSpec(a.shape, lambda i: (0,) * a.ndim)

    out = pl.pallas_call(
        _dqn_kernel,
        out_shape=jax.ShapeDtypeStruct((B_pad, A), jnp.float32),
        grid_spec=pltpu.PrefetchScalarGridSpec(
            num_scalar_prefetch=0,
            grid=grid,
            in_specs=[
                pl.BlockSpec((TM, S), lambda i: (i, 0)),   # x: tiled over batch
                const(w1), const(b1),
                const(w2), const(b2),
                const(w3), const(b3),
            ],
            # Last dim of the output block equals the full array dim (A), so no
            # 128-lane padding / padded writeback is needed.
            out_specs=pl.BlockSpec((TM, A), lambda i: (i, 0)),
        ),
        compiler_params=pltpu.CompilerParams(
            dimension_semantics=("parallel",)),
    )(x_p, w1, b1, w2, b2, w3, b3)

    # Strip batch padding (no column slice needed: A is unpadded).
    return out[:B] if B_pad != B else out


def init_dqn_params(key, state_size, action_size, hidden=_HIDDEN):
    """Deterministic init matching PyTorch nn.Linear's U(-1/sqrt(fan_in), +)."""
    ks = jax.random.split(key, 6)

    def linear(kw, kb, fan_in, fan_out):
        bound = 1.0 / jnp.sqrt(fan_in)
        w = jax.random.uniform(kw, (fan_in, fan_out), jnp.float32, -bound, bound)
        b = jax.random.uniform(kb, (1, fan_out), jnp.float32, -bound, bound)
        return w, b

    w1, b1 = linear(ks[0], ks[1], state_size, hidden)
    w2, b2 = linear(ks[2], ks[3], hidden, hidden)
    w3, b3 = linear(ks[4], ks[5], hidden, action_size)
    return w1, b1, w2, b2, w3, b3


if __name__ == "__main__":
    state_size = 16
    action_size = 4
    batch = 8

    key = jax.random.PRNGKey(0)
    pkey, xkey = jax.random.split(key)

    params_f32 = init_dqn_params(pkey, state_size, action_size)
    params = prepare_dqn_params(*params_f32)   # one-time bf16/f32 conversion
    x = jax.random.normal(xkey, (batch, state_size), jnp.float32)

    out = dqn_forward(x, *params)
    jax.block_until_ready(out)

    # Reference check in plain f32 JAX (kernel uses bf16 MXU operands with f32
    # accumulation, so compare with a bf16-appropriate tolerance).
    w1, b1, w2, b2, w3, b3 = params_f32
    h1 = jnp.maximum(x @ w1 + b1, 0.0)
    h2 = jnp.maximum(h1 @ w2 + b2, 0.0)
    ref = h2 @ w3 + b3

    assert out.shape == (batch, action_size)
    assert out.dtype == jnp.float32
    assert jnp.allclose(out, ref, atol=5e-2, rtol=5e-2), (
        f"max abs err = {jnp.max(jnp.abs(out - ref))}")

    print("KERNEL_OK")
</pallas_src>

<mosaic_0001>
module attributes {stable_mosaic.version = 11 : i64} {
  func.func @_dqn_kernel(%arg0: i32, %arg1: memref<16x16xf32, #tpu.memory_space<vmem>>, %arg2: memref<16x64xbf16, #tpu.memory_space<vmem>>, %arg3: memref<1x64xf32, #tpu.memory_space<vmem>>, %arg4: memref<64x64xbf16, #tpu.memory_space<vmem>>, %arg5: memref<1x64xf32, #tpu.memory_space<vmem>>, %arg6: memref<64x4xbf16, #tpu.memory_space<vmem>>, %arg7: memref<1x4xf32, #tpu.memory_space<vmem>>, %arg8: memref<16x4xf32, #tpu.memory_space<vmem>>) attributes {dimension_semantics = [#tpu.dimension_semantics<parallel>], iteration_bounds = array<i64: 1>, scalar_prefetch = 0 : i64, scratch_operands = 0 : i64, tpu.core_type = #tpu.core_type<tc>, window_params = [{transform_indices = @transform_0, window_bounds = array<i64: 16, 16>}, {pipeline_mode = #tpu.pipeline_mode<synchronous>, transform_indices = @transform_1, window_bounds = array<i64: 16, 64>}, {pipeline_mode = #tpu.pipeline_mode<synchronous>, transform_indices = @transform_2, window_bounds = array<i64: 1, 64>}, {pipeline_mode = #tpu.pipeline_mode<synchronous>, transform_indices = @transform_3, window_bounds = array<i64: 64, 64>}, {pipeline_mode = #tpu.pipeline_mode<synchronous>, transform_indices = @transform_4, window_bounds = array<i64: 1, 64>}, {pipeline_mode = #tpu.pipeline_mode<synchronous>, transform_indices = @transform_5, window_bounds = array<i64: 64, 4>}, {pipeline_mode = #tpu.pipeline_mode<synchronous>, transform_indices = @transform_6, window_bounds = array<i64: 1, 4>}, {transform_indices = @transform_7, window_bounds = array<i64: 16, 4>}]} {
    %c0 = arith.constant 0 : index
    %c0_0 = arith.constant 0 : index
    %0 = vector.load %arg1[%c0, %c0_0] : memref<16x16xf32, #tpu.memory_space<vmem>>, vector<16x16xf32>
    %1 = arith.truncf %0 : vector<16x16xf32> to vector<16x16xbf16>
    %c0_1 = arith.constant 0 : index
    %c0_2 = arith.constant 0 : index
    %2 = vector.load %arg2[%c0_1, %c0_2] : memref<16x64xbf16, #tpu.memory_space<vmem>>, vector<16x64xbf16>
    %cst = arith.constant dense<0.000000e+00> : vector<16x64xf32>
    %3 = tpu.matmul %1, %2, %cst {dimension_numbers = #tpu.dot_dimension_numbers<[1], [0], [0], [1], [0, 0, 1, 1], [], []>} : vector<16x16xbf16>, vector<16x64xbf16>, vector<16x64xf32> -> vector<16x64xf32>
    %c0_3 = arith.constant 0 : index
    %c0_4 = arith.constant 0 : index
    %4 = vector.load %arg3[%c0_3, %c0_4] : memref<1x64xf32, #tpu.memory_space<vmem>>, vector<1x64xf32>
    %5 = vector.broadcast %4 : vector<1x64xf32> to vector<16x64xf32>
    %6 = arith.addf %3, %5 : vector<16x64xf32>
    %cst_5 = arith.constant 0.000000e+00 : f32
    %7 = vector.broadcast %cst_5 : f32 to vector<16x64xf32>
    %8 = arith.maximumf %6, %7 : vector<16x64xf32>
    %9 = arith.truncf %8 : vector<16x64xf32> to vector<16x64xbf16>
    %c0_6 = arith.constant 0 : index
    %c0_7 = arith.constant 0 : index
    %10 = vector.load %arg4[%c0_6, %c0_7] : memref<64x64xbf16, #tpu.memory_space<vmem>>, vector<64x64xbf16>
    %cst_8 = arith.constant dense<0.000000e+00> : vector<16x64xf32>
    %11 = tpu.matmul %9, %10, %cst_8 {dimension_numbers = #tpu.dot_dimension_numbers<[1], [0], [0], [1], [0, 0, 1, 1], [], []>} : vector<16x64xbf16>, vector<64x64xbf16>, vector<16x64xf32> -> vector<16x64xf32>
    %c0_9 = arith.constant 0 : index
    %c0_10 = arith.constant 0 : index
    %12 = vector.load %arg5[%c0_9, %c0_10] : memref<1x64xf32, #tpu.memory_space<vmem>>, vector<1x64xf32>
    %13 = vector.broadcast %12 : vector<1x64xf32> to vector<16x64xf32>
    %14 = arith.addf %11, %13 : vector<16x64xf32>
    %cst_11 = arith.constant 0.000000e+00 : f32
    %15 = vector.broadcast %cst_11 : f32 to vector<16x64xf32>
    %16 = arith.maximumf %14, %15 : vector<16x64xf32>
    %17 = arith.truncf %16 : vector<16x64xf32> to vector<16x64xbf16>
    %c0_12 = arith.constant 0 : index
    %c0_13 = arith.constant 0 : index
    %18 = vector.load %arg6[%c0_12, %c0_13] : memref<64x4xbf16, #tpu.memory_space<vmem>>, vector<64x4xbf16>
    %cst_14 = arith.constant dense<0.000000e+00> : vector<16x4xf32>
    %19 = tpu.matmul %17, %18, %cst_14 {dimension_numbers = #tpu.dot_dimension_numbers<[1], [0], [0], [1], [0, 0, 1, 1], [], []>} : vector<16x64xbf16>, vector<64x4xbf16>, vector<16x4xf32> -> vector<16x4xf32>
    %c0_15 = arith.constant 0 : index
    %c0_16 = arith.constant 0 : index
    %20 = vector.load %arg7[%c0_15, %c0_16] : memref<1x4xf32, #tpu.memory_space<vmem>>, vector<1x4xf32>
    %21 = vector.broadcast %20 : vector<1x4xf32> to vector<16x4xf32>
    %22 = arith.addf %19, %21 : vector<16x4xf32>
    %c0_17 = arith.constant 0 : index
    %c0_18 = arith.constant 0 : index
    %23 = vector.load %arg8[%c0_17, %c0_18] : memref<16x4xf32, #tpu.memory_space<vmem>>, vector<16x4xf32>
    tpu.vector_store %arg8[%c0_17, %c0_18], %22 {strides = array<i32>} : memref<16x4xf32, #tpu.memory_space<vmem>>, vector<16x4xf32>,
    return
  }
  func.func @transform_0(%arg0: i32) -> (i32, i32) {
    %c0_i32 = arith.constant 0 : i32
    %c0_i32_0 = arith.constant 0 : i32
    return %arg0, %c0_i32 : i32, i32
  }
  func.func @transform_1(%arg0: i32) -> (i32, i32) {
    %c0_i32 = arith.constant 0 : i32
    %c0_i32_0 = arith.constant 0 : i32
    %c0_i32_1 = arith.constant 0 : i32
    return %c0_i32, %c0_i32_0 : i32, i32
  }
  func.func @transform_2(%arg0: i32) -> (i32, i32) {
    %c0_i32 = arith.constant 0 : i32
    %c0_i32_0 = arith.constant 0 : i32
    %c0_i32_1 = arith.constant 0 : i32
    return %c0_i32, %c0_i32_0 : i32, i32
  }
  func.func @transform_3(%arg0: i32) -> (i32, i32) {
    %c0_i32 = arith.constant 0 : i32
    %c0_i32_0 = arith.constant 0 : i32
    %c0_i32_1 = arith.constant 0 : i32
    return %c0_i32, %c0_i32_0 : i32, i32
  }
  func.func @transform_4(%arg0: i32) -> (i32, i32) {
    %c0_i32 = arith.constant 0 : i32
    %c0_i32_0 = arith.constant 0 : i32
    %c0_i32_1 = arith.constant 0 : i32
    return %c0_i32, %c0_i32_0 : i32, i32
  }
  func.func @transform_5(%arg0: i32) -> (i32, i32) {
    %c0_i32 = arith.constant 0 : i32
    %c0_i32_0 = arith.constant 0 : i32
    %c0_i32_1 = arith.constant 0 : i32
    return %c0_i32, %c0_i32_0 : i32, i32
  }
  func.func @transform_6(%arg0: i32) -> (i32, i32) {
    %c0_i32 = arith.constant 0 : i32
    %c0_i32_0 = arith.constant 0 : i32
    %c0_i32_1 = arith.constant 0 : i32
    return %c0_i32, %c0_i32_0 : i32, i32
  }
  func.func @transform_7(%arg0: i32) -> (i32, i32) {
    %c0_i32 = arith.constant 0 : i32
    %c0_i32_0 = arith.constant 0 : i32
    return %arg0, %c0_i32 : i32, i32
  }
}

</mosaic_0001>

<llo_original>
// kernel: dqn_forward.1
$region0: #{dqn_forward.1}
  #allocation0 [shape = 'u32[]', space=smem, size = 0x4, offset = 0x4, fixed_abs, tag = 'smem constant byte address 0x4 - core index']
  #allocation1 [shape = 'u32[144,128]{1,0:T(1,128)}', space=vmem, size = 0x12000, scoped, tag = 'internal scratch']
  %s0 = inlined_call_operand.vmem [shape: f32[16,16], index: 0, kind: input, shape index: {}]
  %s1 = inlined_call_operand.vmem [shape: bf16[16,64], index: 1, kind: input, shape index: {}]
  %s2 = inlined_call_operand.vmem [shape: f32[1,64], index: 2, kind: input, shape index: {}]
  %s3 = inlined_call_operand.vmem [shape: bf16[64,64], index: 3, kind: input, shape index: {}]
  %s4 = inlined_call_operand.vmem [shape: f32[1,64], index: 4, kind: input, shape index: {}]
  %s5 = inlined_call_operand.vmem [shape: bf16[64,4], index: 5, kind: input, shape index: {}]
  %s6 = inlined_call_operand.vmem [shape: f32[1,4], index: 6, kind: input, shape index: {}]
  %s7 = inlined_call_operand.vmem [shape: f32[16,4], index: 7, kind: output, shape index: {}]
  %s8 = sld [smem:[#allocation0]]
  $region38: #{dqn_forward.1} parent=0
    _
  %s10 = ssub.s32 1, %s8
  %s11 = scalar_select 0, %s10, %s8
  // Predicated region
  $region2: #{dqn_forward.1} parent=0 // pred_check
    _
  $region3: #{dqn_forward.1} parent=0 // pred_check_branch
    %13 = sbr.rel (0) target = $region5
  $region4: #{dqn_forward.1} parent=0 // pred_region
    _
  $region5: #{dqn_forward.1} parent=0 // pred_fallthru
    _
  // Predicated region
  $region6: #{dqn_forward.1} parent=0 // pred_check
    _
  $region7: #{dqn_forward.1} parent=0 // pred_check_branch
    %15 = sbr.rel (0) target = $region9
  $region8: #{dqn_forward.1} parent=0 // pred_region
    _
  $region9: #{dqn_forward.1} parent=0 // pred_fallthru
    _
  // Predicated region
  $region10: #{dqn_forward.1} parent=0 // pred_check
    _
  $region11: #{dqn_forward.1} parent=0 // pred_check_branch
    %17 = sbr.rel (0) target = $region13
  $region12: #{dqn_forward.1} parent=0 // pred_region
    _
  $region13: #{dqn_forward.1} parent=0 // pred_fallthru
    _
  // Predicated region
  $region14: #{dqn_forward.1} parent=0 // pred_check
    _
  $region15: #{dqn_forward.1} parent=0 // pred_check_branch
    %19 = sbr.rel (0) target = $region17
  $region16: #{dqn_forward.1} parent=0 // pred_region
    _
  $region17: #{dqn_forward.1} parent=0 // pred_fallthru
    _
  // Predicated region
  $region18: #{dqn_forward.1} parent=0 // pred_check
    _
  $region19: #{dqn_forward.1} parent=0 // pred_check_branch
    %21 = sbr.rel (0) target = $region21
  $region20: #{dqn_forward.1} parent=0 // pred_region
    _
  $region21: #{dqn_forward.1} parent=0 // pred_fallthru
    _
  // Predicated region
  $region22: #{dqn_forward.1} parent=0 // pred_check
    _
  $region23: #{dqn_forward.1} parent=0 // pred_check_branch
    %23 = sbr.rel (0) target = $region25
  $region24: #{dqn_forward.1} parent=0 // pred_region
    _
  $region25: #{dqn_forward.1} parent=0 // pred_fallthru
    _
  // Predicated region
  $region26: #{dqn_forward.1} parent=0 // pred_check
    _
  $region27: #{dqn_forward.1} parent=0 // pred_check_branch
    %25 = sbr.rel (0) target = $region29
  $region28: #{dqn_forward.1} parent=0 // pred_region
    _
  $region29: #{dqn_forward.1} parent=0 // pred_fallthru
    _
  %v27 = vld [vmem:[%s0] sm:$0xff]
  %v28 = vld [vmem:[%s0 + $0x8] sm:$0xff]
  %v29 = vpack.c.bf16 %v28, %v27
  %v30 = vld [vmem:[%s1] sm:$0xf]
  %v31 = vld [vmem:[%s1 + $0x4] sm:$0xf]
  %v32 = vld [vmem:[%s2] sm:$0x1]
  %v34 = vlaneseq
  %v35 = vshrl.u32 %v34, 7
  %v36 = vsub.s32 0, %v35
  %v37 = vrot.slane %v32, %v36
  %v41 = vunpack.c.l.b16 %v30
  %v42 = vunpack.c.l.b16 %v31
  %v43 = vpack.c.b16 %v42, %v41
  %vm45 = vcmask 130048
  %v47 = vsel %vm45, %v29, 0
  %49 = vmatprep.subr.bf16.mxu0 0
  %50 = vmatpush1.bf16.msra.mxu0 %v43
  %51 = vmatprep.subr.bf16.mxu0 0
  %52 = vmatpush1.bf16.msra.mxu0 0
  %53 = vmatprep.subr.bf16.mxu0 0
  %54 = vmatpush1.bf16.msra.mxu0 0
  %55 = vmatprep.subr.bf16.mxu0 0
  %56 = vmatpush1.bf16.msra.mxu0 0
  %57 = vmatprep.subr.bf16.mxu0 0
  %58 = vmatpush1.bf16.msra.mxu0 0
  %59 = vmatprep.subr.bf16.mxu0 0
  %60 = vmatpush1.bf16.msra.mxu0 0
  %61 = vmatprep.subr.bf16.mxu0 0
  %62 = vmatpush1.bf16.msra.mxu0 0
  %63 = vmatprep.subr.bf16.mxu0 0
  %64 = vmatpush1.bf16.msra.mxu0 0
  %65 = vmatprep.subr.bf16.mxu0 0
  %66 = vmatpush1.bf16.msra.mxu0 0
  %67 = vmatprep.subr.bf16.mxu0 0
  %68 = vmatpush1.bf16.msra.mxu0 0
  %69 = vmatprep.subr.bf16.mxu0 0
  %70 = vmatpush1.bf16.msra.mxu0 0
  %71 = vmatprep.subr.bf16.mxu0 0
  %72 = vmatpush1.bf16.msra.mxu0 0
  %73 = vmatprep.subr.bf16.mxu0 0
  %74 = vmatpush1.bf16.msra.mxu0 0
  %75 = vmatprep.subr.bf16.mxu0 0
  %76 = vmatpush1.bf16.msra.mxu0 0
  %77 = vmatprep.subr.bf16.mxu0 0
  %78 = vmatpush1.bf16.msra.mxu0 0
  %79 = vmatprep.subr.bf16.mxu0 0
  %80 = vmatpush1.bf16.msra.mxu0 0
  %81 = vmatprep.mubr.bf16.mxu0 0
  %82 = vmatmul.mubr.bf16.gmra.mrb[0].mxu0 %v47
  %v83 = vpop.f32.mrb[0].mxu0
  %v84 = vadd.f32 %v37, %v83
  %v85 = vpop.f32.mrb[0].mxu0
  %v86 = vpop.f32.mrb[0].mxu0
  %v87 = vadd.f32 %v37, %v86
  %v88 = vpop.f32.mrb[0].mxu0
  %89 = vdwg.mxu0
  %v90 = vmax.f32 %v84, 0.0
  %v91 = vmax.f32 %v87, 0.0
  %v92 = vpack.c.bf16 %v91, %v90
  %v93 = vld [vmem:[%s3] sm:$0xf]
  %v94 = vld [vmem:[%s3 + $0x4] sm:$0xf]
  %v95 = vld [vmem:[%s3 + $0x8] sm:$0xf]
  %v96 = vld [vmem:[%s3 + $0xc] sm:$0xf]
  %v97 = vld [vmem:[%s3 + $0x10] sm:$0xf]
  %v98 = vld [vmem:[%s3 + $0x14] sm:$0xf]
  %v99 = vld [vmem:[%s3 + $0x18] sm:$0xf]
  %v100 = vld [vmem:[%s3 + $0x1c] sm:$0xf]
  %v101 = vld [vmem:[%s4] sm:$0x1]
  %v103 = vlaneseq
  %v104 = vshrl.u32 %v103, 7
  %v105 = vsub.s32 0, %v104
  %v106 = vrot.slane %v101, %v105
  %v116 = vunpack.c.l.b16 %v93
  %v117 = vunpack.c.l.b16 %v94
  %v118 = vunpack.c.l.b16 %v95
  %v119 = vunpack.c.l.b16 %v96
  %v120 = vunpack.c.l.b16 %v97
  %v121 = vunpack.c.l.b16 %v98
  %v122 = vunpack.c.l.b16 %v99
  %v123 = vunpack.c.l.b16 %v100
  %v124 = vpack.c.b16 %v117, %v116
  %v125 = vpack.c.b16 %v119, %v118
  %v126 = vpack.c.b16 %v121, %v120
  %v127 = vpack.c.b16 %v123, %v122
  %vm132 = vcmask 523264
  %v134 = vsel %vm132, %v92, 0
  %136 = vmatprep.subr.bf16.mxu0 0
  %137 = vmatpush1.bf16.msra.mxu0 %v124
  %138 = vmatprep.subr.bf16.mxu0 0
  %139 = vmatpush1.bf16.msra.mxu0 %v125
  %140 = vmatprep.subr.bf16.mxu0 0
  %141 = vmatpush1.bf16.msra.mxu0 %v126
  %142 = vmatprep.subr.bf16.mxu0 0
  %143 = vmatpush1.bf16.msra.mxu0 %v127
  %144 = vmatprep.subr.bf16.mxu0 0
  %145 = vmatpush1.bf16.msra.mxu0 0
  %146 = vmatprep.subr.bf16.mxu0 0
  %147 = vmatpush1.bf16.msra.mxu0 0
  %148 = vmatprep.subr.bf16.mxu0 0
  %149 = vmatpush1.bf16.msra.mxu0 0
  %150 = vmatprep.subr.bf16.mxu0 0
  %151 = vmatpush1.bf16.msra.mxu0 0
  %152 = vmatprep.subr.bf16.mxu0 0
  %153 = vmatpush1.bf16.msra.mxu0 0
  %154 = vmatprep.subr.bf16.mxu0 0
  %155 = vmatpush1.bf16.msra.mxu0 0
  %156 = vmatprep.subr.bf16.mxu0 0
  %157 = vmatpush1.bf16.msra.mxu0 0
  %158 = vmatprep.subr.bf16.mxu0 0
  %159 = vmatpush1.bf16.msra.mxu0 0
  %160 = vmatprep.subr.bf16.mxu0 0
  %161 = vmatpush1.bf16.msra.mxu0 0
  %162 = vmatprep.subr.bf16.mxu0 0
  %163 = vmatpush1.bf16.msra.mxu0 0
  %164 = vmatprep.subr.bf16.mxu0 0
  %165 = vmatpush1.bf16.msra.mxu0 0
  %166 = vmatprep.subr.bf16.mxu0 0
  %167 = vmatpush1.bf16.msra.mxu0 0
  %168 = vmatprep.mubr.bf16.mxu0 0
  %169 = vmatmul.mubr.bf16.gmra.mrb[0].mxu0 %v134
  %v170 = vpop.f32.mrb[0].mxu0
  %v171 = vadd.f32 %v106, %v170
  %v172 = vpop.f32.mrb[0].mxu0
  %v173 = vpop.f32.mrb[0].mxu0
  %v174 = vadd.f32 %v106, %v173
  %v175 = vpop.f32.mrb[0].mxu0
  %176 = vdwg.mxu0
  %v177 = vmax.f32 %v171, 0.0
  %v178 = vmax.f32 %v174, 0.0
  %v179 = vpack.c.bf16 %v178, %v177
  %v180 = vld [vmem:[%s5] sm:$0xf]
  %v181 = vld [vmem:[%s5 + $0x4] sm:$0xf]
  %v182 = vld [vmem:[%s5 + $0x8] sm:$0xf]
  %v183 = vld [vmem:[%s5 + $0xc] sm:$0xf]
  %v184 = vld [vmem:[%s5 + $0x10] sm:$0xf]
  %v185 = vld [vmem:[%s5 + $0x14] sm:$0xf]
  %v186 = vld [vmem:[%s5 + $0x18] sm:$0xf]
  %v187 = vld [vmem:[%s5 + $0x1c] sm:$0xf]
  %v188 = vld [vmem:[%s6] sm:$0x1]
  %v190 = vlaneseq
  %v191 = vshrl.u32 %v190, 7
  %v192 = vsub.s32 0, %v191
  %v193 = vrot.slane %v188, %v192
  %v203 = vunpack.c.l.b16 %v180
  %v204 = vunpack.c.l.b16 %v181
  %v205 = vunpack.c.l.b16 %v182
  %v206 = vunpack.c.l.b16 %v183
  %v207 = vunpack.c.l.b16 %v184
  %v208 = vunpack.c.l.b16 %v185
  %v209 = vunpack.c.l.b16 %v186
  %v210 = vunpack.c.l.b16 %v187
  %v211 = vpack.c.b16 %v204, %v203
  %v212 = vpack.c.b16 %v206, %v205
  %v213 = vpack.c.b16 %v208, %v207
  %v214 = vpack.c.b16 %v210, %v209
  %v220 = vsel %vm132, %v179, 0
  %222 = vmatprep.subr.bf16.mxu0 0
  %223 = vmatpush1.bf16.msra.mxu0 %v211
  %224 = vmatprep.subr.bf16.mxu0 0
  %225 = vmatpush1.bf16.msra.mxu0 %v212
  %226 = vmatprep.subr.bf16.mxu0 0
  %227 = vmatpush1.bf16.msra.mxu0 %v213
  %228 = vmatprep.subr.bf16.mxu0 0
  %229 = vmatpush1.bf16.msra.mxu0 %v214
  %230 = vmatprep.subr.bf16.mxu0 0
  %231 = vmatpush1.bf16.msra.mxu0 0
  %232 = vmatprep.subr.bf16.mxu0 0
  %233 = vmatpush1.bf16.msra.mxu0 0
  %234 = vmatprep.subr.bf16.mxu0 0
  %235 = vmatpush1.bf16.msra.mxu0 0
  %236 = vmatprep.subr.bf16.mxu0 0
  %237 = vmatpush1.bf16.msra.mxu0 0
  %238 = vmatprep.subr.bf16.mxu0 0
  %239 = vmatpush1.bf16.msra.mxu0 0
  %240 = vmatprep.subr.bf16.mxu0 0
  %241 = vmatpush1.bf16.msra.mxu0 0
  %242 = vmatprep.subr.bf16.mxu0 0
  %243 = vmatpush1.bf16.msra.mxu0 0
  %244 = vmatprep.subr.bf16.mxu0 0
  %245 = vmatpush1.bf16.msra.mxu0 0
  %246 = vmatprep.subr.bf16.mxu0 0
  %247 = vmatpush1.bf16.msra.mxu0 0
  %248 = vmatprep.subr.bf16.mxu0 0
  %249 = vmatpush1.bf16.msra.mxu0 0
  %250 = vmatprep.subr.bf16.mxu0 0
  %251 = vmatpush1.bf16.msra.mxu0 0
  %252 = vmatprep.subr.bf16.mxu0 0
  %253 = vmatpush1.bf16.msra.mxu0 0
  %254 = vmatprep.mubr.bf16.mxu0 0
  %255 = vmatmul.mubr.bf16.gmra.mrb[0].mxu0 %v220
  %v256 = vpop.f32.mrb[0].mxu0
  %v257 = vadd.f32 %v193, %v256
  %v258 = vpop.f32.mrb[0].mxu0
  %v259 = vpop.f32.mrb[0].mxu0
  %v260 = vadd.f32 %v193, %v259
  %v261 = vpop.f32.mrb[0].mxu0
  %262 = vdwg.mxu0
  %vm263 = vcmask 31744
  %264 = vst.msk [vmem:[%s7] sm:$0xff] %vm263, %v257
  %265 = vst.msk [vmem:[%s7 + $0x8] sm:$0xff] %vm263, %v260
  // Predicated region
  $region30: #{dqn_forward.1} parent=0 // pred_check
    _
  $region31: #{dqn_forward.1} parent=0 // pred_check_branch
    %267 = sbr.rel (0) target = $region33
  $region32: #{dqn_forward.1} parent=0 // pred_region
    _
  $region33: #{dqn_forward.1} parent=0 // pred_fallthru
    _
  // Predicated region
  $region34: #{dqn_forward.1} parent=0 // pred_check
    _
  $region35: #{dqn_forward.1} parent=0 // pred_check_branch
    %269 = sbr.rel (0) target = $region37
  $region36: #{dqn_forward.1} parent=0 // pred_region
    _
  $region37: #{dqn_forward.1} parent=0 // pred_fallthru
    _

</llo_original>
